<compile_context>
chip_gen: v6e
topology: v6e:2x2x1
jax: 0.10.0
libtpu: 0.0.40
codegen_flags: <defaults>
</compile_context>

<pallas_src>
import jax
import jax.numpy as jnp
from jax import lax
from jax.experimental import pallas as pl
from jax.experimental.pallas import tpu as pltpu


def channel_kernel(x_ref, w_ref, shift_ref, o_ref):
    bc, T, C, HW = x_ref.shape

    # ---- Pass 1: mean over (T-1, HW) of squared temporal differences -------
    # Unrolled frame loop: only ~2 f32 frames + one diff are live at a time.
    def pool_step(t, carry):
        prev, acc = carry
        cur = x_ref[:, pl.ds(t, 1), :, :].astype(jnp.float32)   # (bc,1,C,HW)
        d = cur - prev
        acc = acc + jnp.sum(d * d, axis=(1, 3))                 # (bc, C) f32
        return cur, acc

    prev0 = x_ref[:, pl.ds(0, 1), :, :].astype(jnp.float32)
    acc0 = jnp.zeros((bc, C), jnp.float32)
    _, acc = lax.fori_loop(1, T, pool_step, (prev0, acc0), unroll=True)
    pooled = acc * (1.0 / ((T - 1) * HW))                       # (bc, C)

    # ---- Linear (BN scale pre-folded into w_ref) + shift + sigmoid ---------
    y = jnp.dot(pooled, w_ref[...], preferred_element_type=jnp.float32)
    gate = jax.nn.sigmoid(y + shift_ref[...])                   # (bc, C) f32

    # ---- Pass 2: excitation, frame by frame, in the I/O dtype --------------
    gate_io = gate.astype(o_ref.dtype)[:, None, :, None]        # (bc,1,C,1)
    for t in range(T):                                          # static unroll
        o_ref[:, pl.ds(t, 1), :, :] = x_ref[:, pl.ds(t, 1), :, :] * gate_io


def _tpu_memory_model():
    """(physical VMEM bytes per core, # TensorCores per chip), with fallbacks."""
    try:
        phys = int(pltpu.get_tpu_info().vmem_capacity_bytes)
        if phys <= 0:
            raise ValueError
    except Exception:
        phys = 64 << 20                      # conservative: v7x-sized VMEM
    try:
        kind = jax.devices()[0].device_kind.lower()
    except Exception:
        kind = ""
    n_cores = 2 if any(k in kind for k in ("v7", "v5p", "v4")) else 1
    return phys, n_cores


def _pick_block_clips(n, per_clip_vmem, vmem_budget, clip_io_bytes,
                      target_block_bytes, min_grid):
    """Clips fused per grid step: biggest block that (a) fits the per-step
    VMEM budget including double-buffered I/O and f32 temporaries, (b) stays
    under the per-generation target block size, (c) keeps >= min_grid steps
    (>=2 pipelined steps per TensorCore), and (d) divides n exactly."""
    bc = min(n,
             max(1, vmem_budget // max(per_clip_vmem, 1)),
             max(1, target_block_bytes // max(clip_io_bytes, 1)))
    bc = int(max(1, bc))
    if n >= min_grid:
        bc = max(1, min(bc, n // min_grid))
    while n % bc:
        bc -= 1
    return bc


def channel_module(x, weight, bn_gamma, bn_beta, bn_mean, bn_var,
                   num_segments=8, eps=1e-5):
    bn_, c, h, w_sp = x.shape
    T = int(num_segments)
    assert bn_ % T == 0 and T >= 2
    n = bn_ // T
    hw = h * w_sp

    # Lane-dense layout: flattened spatial axis on the 128-lane axis.
    # TODO(synk): for hw % 128 != 0 (7x7/14x14/28x28 maps) a fused (C*HW) lane
    # layout (gate broadcast in-kernel) would avoid masked vst.msk stores.
    xg = x.reshape(n, T, c, hw)

    # Fold eval-mode BatchNorm1d into the linear weight / a shift vector.
    scale = bn_gamma / jnp.sqrt(bn_var + eps)                    # (C,)
    shift = bn_beta - bn_mean * scale                            # (C,)
    w_folded = (weight * scale[:, None]).T.astype(jnp.float32)   # (Cin, Cout)
    shift2d = shift.reshape(1, c).astype(jnp.float32)

    # --- per-generation VMEM budgeting --------------------------------------
    phys_vmem, n_cores = _tpu_memory_model()
    vmem_budget = max(min(phys_vmem - (16 << 20), 96 << 20), 24 << 20)
    target_block = (6 << 20) if phys_vmem <= (64 << 20) else (16 << 20)
    min_grid = 2 * n_cores

    itemsize = x.dtype.itemsize
    clip_io = T * c * hw * itemsize            # one clip, I/O dtype
    frame_io = c * hw * itemsize
    frame_f32 = c * hw * 4
    # 2x double-buffered input + 2x output blocks, ~3 live f32 frames in the
    # pooling loop, ~2 I/O-dtype frames in the gating loop.
    per_clip_vmem = 4 * clip_io + 3 * frame_f32 + 2 * frame_io

    bc = _pick_block_clips(n, per_clip_vmem, vmem_budget, clip_io,
                           target_block, min_grid)
    grid = (n // bc,)

    # TODO(synk): clips too large for VMEM (e.g. C=512, 28x28 on v7x) need a
    # streaming fallback (x in HBM + inner emit_pipeline over HW chunks).
    need = bc * per_clip_vmem + (4 << 20)
    vmem_limit = int(min(max(need, 32 << 20), phys_vmem - (4 << 20)))

    cost = pl.CostEstimate(
        flops=int(3 * xg.size + 2 * n * c * c),
        transcendentals=int(n * c),
        bytes_accessed=int(2 * xg.size * itemsize + w_folded.size * 4),
    )

    out = pl.pallas_call(
        channel_kernel,
        out_shape=jax.ShapeDtypeStruct((n, T, c, hw), x.dtype),
        grid_spec=pltpu.PrefetchScalarGridSpec(
            num_scalar_prefetch=0,
            grid=grid,
            in_specs=[
                pl.BlockSpec((bc, T, c, hw), lambda i: (i, 0, 0, 0)),
                pl.BlockSpec((c, c), lambda i: (0, 0)),
                pl.BlockSpec((1, c), lambda i: (0, 0)),
            ],
            out_specs=pl.BlockSpec((bc, T, c, hw), lambda i: (i, 0, 0, 0)),
        ),
        compiler_params=pltpu.CompilerParams(
            dimension_semantics=("parallel",),
            vmem_limit_bytes=vmem_limit,
        ),
        cost_estimate=cost,
    )(xg, w_folded, shift2d)
    return out.reshape(bn_, c, h, w_sp)


def reference(x, weight, bn_gamma, bn_beta, bn_mean, bn_var, T, eps=1e-5):
    """Pure-JAX reference mirroring the PyTorch forward (eval-mode BN)."""
    bn_, c, h, w_sp = x.shape
    n = bn_ // T
    xg = x.reshape(n, T, c, h, w_sp)
    d = xg[:, 1:] - xg[:, :-1]
    pooled = jnp.mean(d * d, axis=(1, 3, 4))                     # (n, c)
    y = pooled @ weight.T
    scale = bn_gamma / jnp.sqrt(bn_var + eps)
    y = y * scale + (bn_beta - bn_mean * scale)
    gate = jax.nn.sigmoid(y)                                     # (n, c)
    out = xg * gate[:, None, :, None, None]
    return out.reshape(bn_, c, h, w_sp)


if __name__ == "__main__":
    # Small shapes consistent with the module: inplanes = planes = C,
    # num_segments = 8, N clips, spatial 16x16.
    N, T, C, H, W = 2, 8, 16, 16, 16
    BN = N * T

    key = jax.random.PRNGKey(0)
    kx, kw = jax.random.split(key)
    x = jax.random.normal(kx, (BN, C, H, W), jnp.float32)

    # nn.Linear(inplanes, planes, bias=False), init normal_(0, 0.001).
    weight = jax.random.normal(kw, (C, C), jnp.float32) * 0.001

    # BatchNorm1d(C), eval mode: gamma=1, beta=0, running_mean=0, running_var=1.
    gamma = jnp.ones((C,), jnp.float32)
    beta = jnp.zeros((C,), jnp.float32)
    rmean = jnp.zeros((C,), jnp.float32)
    rvar = jnp.ones((C,), jnp.float32)

    # --- f32 I/O path: strict check against the reference ---
    out = jax.block_until_ready(
        channel_module(x, weight, gamma, beta, rmean, rvar, num_segments=T))
    ref = reference(x, weight, gamma, beta, rmean, rvar, T)
    assert out.shape == (BN, C, H, W)
    assert jnp.allclose(out, ref, atol=1e-5, rtol=1e-5), \
        float(jnp.max(jnp.abs(out - ref)))

    # --- bf16 I/O path: half the HBM traffic; pooled/matmul/sigmoid stay f32,
    # the gating multiply runs in bf16 -> bf16-level tolerance.
    x_bf = x.astype(jnp.bfloat16)
    out_bf = jax.block_until_ready(
        channel_module(x_bf, weight, gamma, beta, rmean, rvar, num_segments=T))
    ref_bf = reference(x_bf.astype(jnp.float32), weight, gamma, beta,
                       rmean, rvar, T)
    assert out_bf.dtype == jnp.bfloat16
    assert jnp.allclose(out_bf.astype(jnp.float32), ref_bf,
                        atol=3e-2, rtol=3e-2), \
        float(jnp.max(jnp.abs(out_bf.astype(jnp.float32) - ref_bf)))

    print("KERNEL_OK")
</pallas_src>

<mosaic_0001>
module attributes {stable_mosaic.version = 11 : i64} {
  func.func @channel_kernel(%arg0: i32, %arg1: memref<1x8x16x256xf32, #tpu.memory_space<vmem>>, %arg2: memref<16x16xf32, #tpu.memory_space<vmem>>, %arg3: memref<1x16xf32, #tpu.memory_space<vmem>>, %arg4: memref<1x8x16x256xf32, #tpu.memory_space<vmem>>) attributes {dimension_semantics = [#tpu.dimension_semantics<parallel>], iteration_bounds = array<i64: 2>, scalar_prefetch = 0 : i64, scratch_operands = 0 : i64, tpu.core_type = #tpu.core_type<tc>, window_params = [{transform_indices = @transform_0, window_bounds = array<i64: 1, 8, 16, 256>}, {pipeline_mode = #tpu.pipeline_mode<synchronous>, transform_indices = @transform_1, window_bounds = array<i64: 16, 16>}, {pipeline_mode = #tpu.pipeline_mode<synchronous>, transform_indices = @transform_2, window_bounds = array<i64: 1, 16>}, {transform_indices = @transform_3, window_bounds = array<i64: 1, 8, 16, 256>}]} {
    %c0 = arith.constant 0 : index
    %c0_0 = arith.constant 0 : index
    %c0_1 = arith.constant 0 : index
    %c0_2 = arith.constant 0 : index
    %0 = vector.load %arg1[%c0, %c0_0, %c0_1, %c0_2] : memref<1x8x16x256xf32, #tpu.memory_space<vmem>>, vector<1x1x16x256xf32>
    %cst = arith.constant 0.000000e+00 : f32
    %1 = vector.broadcast %cst : f32 to vector<1x16xf32>
    %c1_i32 = arith.constant 1 : i32
    %c0_3 = arith.constant 0 : index
    %2 = arith.index_cast %c1_i32 : i32 to index
    %c0_4 = arith.constant 0 : index
    %c0_5 = arith.constant 0 : index
    %3 = vector.load %arg1[%c0_3, %2, %c0_4, %c0_5] : memref<1x8x16x256xf32, #tpu.memory_space<vmem>>, vector<1x1x16x256xf32>
    %4 = arith.subf %3, %0 : vector<1x1x16x256xf32>
    %5 = arith.mulf %4, %4 : vector<1x1x16x256xf32>
    %cst_6 = arith.constant dense<0.000000e+00> : vector<1x16xf32>
    %6 = vector.multi_reduction <add>, %5, %cst_6 [1, 3] : vector<1x1x16x256xf32> to vector<1x16xf32>
    %7 = arith.addf %1, %6 : vector<1x16xf32>
    %c2_i32 = arith.constant 2 : i32
    %c0_7 = arith.constant 0 : index
    %8 = arith.index_cast %c2_i32 : i32 to index
    %c0_8 = arith.constant 0 : index
    %c0_9 = arith.constant 0 : index
    %9 = vector.load %arg1[%c0_7, %8, %c0_8, %c0_9] : memref<1x8x16x256xf32, #tpu.memory_space<vmem>>, vector<1x1x16x256xf32>
    %10 = arith.subf %9, %3 : vector<1x1x16x256xf32>
    %11 = arith.mulf %10, %10 : vector<1x1x16x256xf32>
    %cst_10 = arith.constant dense<0.000000e+00> : vector<1x16xf32>
    %12 = vector.multi_reduction <add>, %11, %cst_10 [1, 3] : vector<1x1x16x256xf32> to vector<1x16xf32>
    %13 = arith.addf %7, %12 : vector<1x16xf32>
    %c3_i32 = arith.constant 3 : i32
    %c0_11 = arith.constant 0 : index
    %14 = arith.index_cast %c3_i32 : i32 to index
    %c0_12 = arith.constant 0 : index
    %c0_13 = arith.constant 0 : index
    %15 = vector.load %arg1[%c0_11, %14, %c0_12, %c0_13] : memref<1x8x16x256xf32, #tpu.memory_space<vmem>>, vector<1x1x16x256xf32>
    %16 = arith.subf %15, %9 : vector<1x1x16x256xf32>
    %17 = arith.mulf %16, %16 : vector<1x1x16x256xf32>
    %cst_14 = arith.constant dense<0.000000e+00> : vector<1x16xf32>
    %18 = vector.multi_reduction <add>, %17, %cst_14 [1, 3] : vector<1x1x16x256xf32> to vector<1x16xf32>
    %19 = arith.addf %13, %18 : vector<1x16xf32>
    %c4_i32 = arith.constant 4 : i32
    %c0_15 = arith.constant 0 : index
    %20 = arith.index_cast %c4_i32 : i32 to index
    %c0_16 = arith.constant 0 : index
    %c0_17 = arith.constant 0 : index
    %21 = vector.load %arg1[%c0_15, %20, %c0_16, %c0_17] : memref<1x8x16x256xf32, #tpu.memory_space<vmem>>, vector<1x1x16x256xf32>
    %22 = arith.subf %21, %15 : vector<1x1x16x256xf32>
    %23 = arith.mulf %22, %22 : vector<1x1x16x256xf32>
    %cst_18 = arith.constant dense<0.000000e+00> : vector<1x16xf32>
    %24 = vector.multi_reduction <add>, %23, %cst_18 [1, 3] : vector<1x1x16x256xf32> to vector<1x16xf32>
    %25 = arith.addf %19, %24 : vector<1x16xf32>
    %c5_i32 = arith.constant 5 : i32
    %c0_19 = arith.constant 0 : index
    %26 = arith.index_cast %c5_i32 : i32 to index
    %c0_20 = arith.constant 0 : index
    %c0_21 = arith.constant 0 : index
    %27 = vector.load %arg1[%c0_19, %26, %c0_20, %c0_21] : memref<1x8x16x256xf32, #tpu.memory_space<vmem>>, vector<1x1x16x256xf32>
    %28 = arith.subf %27, %21 : vector<1x1x16x256xf32>
    %29 = arith.mulf %28, %28 : vector<1x1x16x256xf32>
    %cst_22 = arith.constant dense<0.000000e+00> : vector<1x16xf32>
    %30 = vector.multi_reduction <add>, %29, %cst_22 [1, 3] : vector<1x1x16x256xf32> to vector<1x16xf32>
    %31 = arith.addf %25, %30 : vector<1x16xf32>
    %c6_i32 = arith.constant 6 : i32
    %c0_23 = arith.constant 0 : index
    %32 = arith.index_cast %c6_i32 : i32 to index
    %c0_24 = arith.constant 0 : index
    %c0_25 = arith.constant 0 : index
    %33 = vector.load %arg1[%c0_23, %32, %c0_24, %c0_25] : memref<1x8x16x256xf32, #tpu.memory_space<vmem>>, vector<1x1x16x256xf32>
    %34 = arith.subf %33, %27 : vector<1x1x16x256xf32>
    %35 = arith.mulf %34, %34 : vector<1x1x16x256xf32>
    %cst_26 = arith.constant dense<0.000000e+00> : vector<1x16xf32>
    %36 = vector.multi_reduction <add>, %35, %cst_26 [1, 3] : vector<1x1x16x256xf32> to vector<1x16xf32>
    %37 = arith.addf %31, %36 : vector<1x16xf32>
    %c7_i32 = arith.constant 7 : i32
    %c0_27 = arith.constant 0 : index
    %38 = arith.index_cast %c7_i32 : i32 to index
    %c0_28 = arith.constant 0 : index
    %c0_29 = arith.constant 0 : index
    %39 = vector.load %arg1[%c0_27, %38, %c0_28, %c0_29] : memref<1x8x16x256xf32, #tpu.memory_space<vmem>>, vector<1x1x16x256xf32>
    %40 = arith.subf %39, %33 : vector<1x1x16x256xf32>
    %41 = arith.mulf %40, %40 : vector<1x1x16x256xf32>
    %cst_30 = arith.constant dense<0.000000e+00> : vector<1x16xf32>
    %42 = vector.multi_reduction <add>, %41, %cst_30 [1, 3] : vector<1x1x16x256xf32> to vector<1x16xf32>
    %43 = arith.addf %37, %42 : vector<1x16xf32>
    %c7_i32_31 = arith.constant 7 : i32
    %cst_32 = arith.constant 5.58035739E-4 : f32
    %44 = vector.broadcast %cst_32 : f32 to vector<1x16xf32>
    %45 = arith.mulf %43, %44 : vector<1x16xf32>
    %c0_33 = arith.constant 0 : index
    %c0_34 = arith.constant 0 : index
    %46 = vector.load %arg2[%c0_33, %c0_34] : memref<16x16xf32, #tpu.memory_space<vmem>>, vector<16x16xf32>
    %cst_35 = arith.constant dense<0.000000e+00> : vector<1x16xf32>
    %47 = tpu.matmul %45, %46, %cst_35 {dimension_numbers = #tpu.dot_dimension_numbers<[1], [0], [0], [1], [0, 0, 1, 1], [], []>} : vector<1x16xf32>, vector<16x16xf32>, vector<1x16xf32> -> vector<1x16xf32>
    %c0_36 = arith.constant 0 : index
    %c0_37 = arith.constant 0 : index
    %48 = vector.load %arg3[%c0_36, %c0_37] : memref<1x16xf32, #tpu.memory_space<vmem>>, vector<1x16xf32>
    %49 = arith.addf %47, %48 : vector<1x16xf32>
    %50 = arith.negf %49 : vector<1x16xf32>
    %51 = math.exp %50 : vector<1x16xf32>
    %cst_38 = arith.constant 1.000000e+00 : f32
    %52 = vector.broadcast %cst_38 : f32 to vector<1x16xf32>
    %53 = arith.addf %52, %51 : vector<1x16xf32>
    %54 = arith.divf %52, %53 : vector<1x16xf32>
    %55 = vector.shape_cast %54 : vector<1x16xf32> to vector<1x1x16x1xf32>
    %c0_39 = arith.constant 0 : index
    %c0_40 = arith.constant 0 : index
    %c0_41 = arith.constant 0 : index
    %c0_42 = arith.constant 0 : index
    %56 = vector.load %arg1[%c0_39, %c0_40, %c0_41, %c0_42] : memref<1x8x16x256xf32, #tpu.memory_space<vmem>>, vector<1x1x16x256xf32>
    %57 = vector.broadcast %55 : vector<1x1x16x1xf32> to vector<1x1x16x256xf32>
    %58 = arith.mulf %56, %57 : vector<1x1x16x256xf32>
    %c0_43 = arith.constant 0 : index
    %c0_44 = arith.constant 0 : index
    %c0_45 = arith.constant 0 : index
    %c0_46 = arith.constant 0 : index
    %59 = vector.load %arg4[%c0_43, %c0_44, %c0_45, %c0_46] : memref<1x8x16x256xf32, #tpu.memory_space<vmem>>, vector<1x1x16x256xf32>
    tpu.vector_store %arg4[%c0_43, %c0_44, %c0_45, %c0_46], %58 {strides = array<i32>} : memref<1x8x16x256xf32, #tpu.memory_space<vmem>>, vector<1x1x16x256xf32>,
    %c0_47 = arith.constant 0 : index
    %c1 = arith.constant 1 : index
    %c0_48 = arith.constant 0 : index
    %c0_49 = arith.constant 0 : index
    %60 = vector.load %arg1[%c0_47, %c1, %c0_48, %c0_49] : memref<1x8x16x256xf32, #tpu.memory_space<vmem>>, vector<1x1x16x256xf32>
    %61 = vector.broadcast %55 : vector<1x1x16x1xf32> to vector<1x1x16x256xf32>
    %62 = arith.mulf %60, %61 : vector<1x1x16x256xf32>
    %c0_50 = arith.constant 0 : index
    %c1_51 = arith.constant 1 : index
    %c0_52 = arith.constant 0 : index
    %c0_53 = arith.constant 0 : index
    %63 = vector.load %arg4[%c0_50, %c1_51, %c0_52, %c0_53] : memref<1x8x16x256xf32, #tpu.memory_space<vmem>>, vector<1x1x16x256xf32>
    tpu.vector_store %arg4[%c0_50, %c1_51, %c0_52, %c0_53], %62 {strides = array<i32>} : memref<1x8x16x256xf32, #tpu.memory_space<vmem>>, vector<1x1x16x256xf32>,
    %c0_54 = arith.constant 0 : index
    %c2 = arith.constant 2 : index
    %c0_55 = arith.constant 0 : index
    %c0_56 = arith.constant 0 : index
    %64 = vector.load %arg1[%c0_54, %c2, %c0_55, %c0_56] : memref<1x8x16x256xf32, #tpu.memory_space<vmem>>, vector<1x1x16x256xf32>
    %65 = vector.broadcast %55 : vector<1x1x16x1xf32> to vector<1x1x16x256xf32>
    %66 = arith.mulf %64, %65 : vector<1x1x16x256xf32>
    %c0_57 = arith.constant 0 : index
    %c2_58 = arith.constant 2 : index
    %c0_59 = arith.constant 0 : index
    %c0_60 = arith.constant 0 : index
    %67 = vector.load %arg4[%c0_57, %c2_58, %c0_59, %c0_60] : memref<1x8x16x256xf32, #tpu.memory_space<vmem>>, vector<1x1x16x256xf32>
    tpu.vector_store %arg4[%c0_57, %c2_58, %c0_59, %c0_60], %66 {strides = array<i32>} : memref<1x8x16x256xf32, #tpu.memory_space<vmem>>, vector<1x1x16x256xf32>,
    %c0_61 = arith.constant 0 : index
    %c3 = arith.constant 3 : index
    %c0_62 = arith.constant 0 : index
    %c0_63 = arith.constant 0 : index
    %68 = vector.load %arg1[%c0_61, %c3, %c0_62, %c0_63] : memref<1x8x16x256xf32, #tpu.memory_space<vmem>>, vector<1x1x16x256xf32>
    %69 = vector.broadcast %55 : vector<1x1x16x1xf32> to vector<1x1x16x256xf32>
    %70 = arith.mulf %68, %69 : vector<1x1x16x256xf32>
    %c0_64 = arith.constant 0 : index
    %c3_65 = arith.constant 3 : index
    %c0_66 = arith.constant 0 : index
    %c0_67 = arith.constant 0 : index
    %71 = vector.load %arg4[%c0_64, %c3_65, %c0_66, %c0_67] : memref<1x8x16x256xf32, #tpu.memory_space<vmem>>, vector<1x1x16x256xf32>
    tpu.vector_store %arg4[%c0_64, %c3_65, %c0_66, %c0_67], %70 {strides = array<i32>} : memref<1x8x16x256xf32, #tpu.memory_space<vmem>>, vector<1x1x16x256xf32>,
    %c0_68 = arith.constant 0 : index
    %c4 = arith.constant 4 : index
    %c0_69 = arith.constant 0 : index
    %c0_70 = arith.constant 0 : index
    %72 = vector.load %arg1[%c0_68, %c4, %c0_69, %c0_70] : memref<1x8x16x256xf32, #tpu.memory_space<vmem>>, vector<1x1x16x256xf32>
    %73 = vector.broadcast %55 : vector<1x1x16x1xf32> to vector<1x1x16x256xf32>
    %74 = arith.mulf %72, %73 : vector<1x1x16x256xf32>
    %c0_71 = arith.constant 0 : index
    %c4_72 = arith.constant 4 : index
    %c0_73 = arith.constant 0 : index
    %c0_74 = arith.constant 0 : index
    %75 = vector.load %arg4[%c0_71, %c4_72, %c0_73, %c0_74] : memref<1x8x16x256xf32, #tpu.memory_space<vmem>>, vector<1x1x16x256xf32>
    tpu.vector_store %arg4[%c0_71, %c4_72, %c0_73, %c0_74], %74 {strides = array<i32>} : memref<1x8x16x256xf32, #tpu.memory_space<vmem>>, vector<1x1x16x256xf32>,
    %c0_75 = arith.constant 0 : index
    %c5 = arith.constant 5 : index
    %c0_76 = arith.constant 0 : index
    %c0_77 = arith.constant 0 : index
    %76 = vector.load %arg1[%c0_75, %c5, %c0_76, %c0_77] : memref<1x8x16x256xf32, #tpu.memory_space<vmem>>, vector<1x1x16x256xf32>
    %77 = vector.broadcast %55 : vector<1x1x16x1xf32> to vector<1x1x16x256xf32>
    %78 = arith.mulf %76, %77 : vector<1x1x16x256xf32>
    %c0_78 = arith.constant 0 : index
    %c5_79 = arith.constant 5 : index
    %c0_80 = arith.constant 0 : index
    %c0_81 = arith.constant 0 : index
    %79 = vector.load %arg4[%c0_78, %c5_79, %c0_80, %c0_81] : memref<1x8x16x256xf32, #tpu.memory_space<vmem>>, vector<1x1x16x256xf32>
    tpu.vector_store %arg4[%c0_78, %c5_79, %c0_80, %c0_81], %78 {strides = array<i32>} : memref<1x8x16x256xf32, #tpu.memory_space<vmem>>, vector<1x1x16x256xf32>,
    %c0_82 = arith.constant 0 : index
    %c6 = arith.constant 6 : index
    %c0_83 = arith.constant 0 : index
    %c0_84 = arith.constant 0 : index
    %80 = vector.load %arg1[%c0_82, %c6, %c0_83, %c0_84] : memref<1x8x16x256xf32, #tpu.memory_space<vmem>>, vector<1x1x16x256xf32>
    %81 = vector.broadcast %55 : vector<1x1x16x1xf32> to vector<1x1x16x256xf32>
    %82 = arith.mulf %80, %81 : vector<1x1x16x256xf32>
    %c0_85 = arith.constant 0 : index
    %c6_86 = arith.constant 6 : index
    %c0_87 = arith.constant 0 : index
    %c0_88 = arith.constant 0 : index
    %83 = vector.load %arg4[%c0_85, %c6_86, %c0_87, %c0_88] : memref<1x8x16x256xf32, #tpu.memory_space<vmem>>, vector<1x1x16x256xf32>
    tpu.vector_store %arg4[%c0_85, %c6_86, %c0_87, %c0_88], %82 {strides = array<i32>} : memref<1x8x16x256xf32, #tpu.memory_space<vmem>>, vector<1x1x16x256xf32>,
    %c0_89 = arith.constant 0 : index
    %c7 = arith.constant 7 : index
    %c0_90 = arith.constant 0 : index
    %c0_91 = arith.constant 0 : index
    %84 = vector.load %arg1[%c0_89, %c7, %c0_90, %c0_91] : memref<1x8x16x256xf32, #tpu.memory_space<vmem>>, vector<1x1x16x256xf32>
    %85 = vector.broadcast %55 : vector<1x1x16x1xf32> to vector<1x1x16x256xf32>
    %86 = arith.mulf %84, %85 : vector<1x1x16x256xf32>
    %c0_92 = arith.constant 0 : index
    %c7_93 = arith.constant 7 : index
    %c0_94 = arith.constant 0 : index
    %c0_95 = arith.constant 0 : index
    %87 = vector.load %arg4[%c0_92, %c7_93, %c0_94, %c0_95] : memref<1x8x16x256xf32, #tpu.memory_space<vmem>>, vector<1x1x16x256xf32>
    tpu.vector_store %arg4[%c0_92, %c7_93, %c0_94, %c0_95], %86 {strides = array<i32>} : memref<1x8x16x256xf32, #tpu.memory_space<vmem>>, vector<1x1x16x256xf32>,
    return
  }
  func.func @transform_0(%arg0: i32) -> (i32, i32, i32, i32) {
    %c0_i32 = arith.constant 0 : i32
    %c0_i32_0 = arith.constant 0 : i32
    %c0_i32_1 = arith.constant 0 : i32
    %c0_i32_2 = arith.constant 0 : i32
    return %arg0, %c0_i32, %c0_i32_0, %c0_i32_1 : i32, i32, i32, i32
  }
  func.func @transform_1(%arg0: i32) -> (i32, i32) {
    %c0_i32 = arith.constant 0 : i32
    %c0_i32_0 = arith.constant 0 : i32
    %c0_i32_1 = arith.constant 0 : i32
    return %c0_i32, %c0_i32_0 : i32, i32
  }
  func.func @transform_2(%arg0: i32) -> (i32, i32) {
    %c0_i32 = arith.constant 0 : i32
    %c0_i32_0 = arith.constant 0 : i32
    %c0_i32_1 = arith.constant 0 : i32
    return %c0_i32, %c0_i32_0 : i32, i32
  }
  func.func @transform_3(%arg0: i32) -> (i32, i32, i32, i32) {
    %c0_i32 = arith.constant 0 : i32
    %c0_i32_0 = arith.constant 0 : i32
    %c0_i32_1 = arith.constant 0 : i32
    %c0_i32_2 = arith.constant 0 : i32
    return %arg0, %c0_i32, %c0_i32_0, %c0_i32_1 : i32, i32, i32, i32
  }
}

</mosaic_0001>

<llo_original>
// kernel: tpu_custom_call.1
$region0: #{tpu_custom_call.1}
  #allocation0 [shape = 'u32[]', space=smem, size = 0x4, offset = 0x4, fixed_abs, tag = 'smem constant byte address 0x4 - core index']
  #allocation1 [shape = 'u32[144,128]{1,0:T(1,128)}', space=vmem, size = 0x12000, scoped, tag = 'internal scratch']
  %s0 = inlined_call_operand.hbm [shape: f32[2,8,16,256], index: 0, kind: input, shape index: {}]
  %s1 = inlined_call_operand.hbm [shape: f32[16,16], index: 1, kind: input, shape index: {}]
  %s2 = inlined_call_operand.vmem [shape: f32[1,16], index: 2, kind: input, shape index: {}]
  %s3 = inlined_call_operand.hbm [shape: f32[2,8,16,256], index: 3, kind: output, shape index: {}]
  %s4 = sld [smem:[#allocation0]]
  $region53: #{tpu_custom_call.1} parent=0
    _
  %s6 = ssub.s32 1, %s4
  %s7 = scalar_select 0, %s6, %s4
  $region1: #{tpu_custom_call.1} parent=0
    #allocation2 [shape = 'u8[262144]{0}', space=vmem, size = 0x40000, scoped, tag = 'input window, operand 0']
    #allocation3 [shape = 's32[2]{0}', space=sflag, size = 0x8, scoped, tag = 'scoped memory for tpu_custom_call.1']
    #allocation4 [shape = 's32[2]{0}', space=sflag, size = 0x8, scoped, tag = 'scoped memory for tpu_custom_call.1']
    #allocation5 [shape = 'u8[8192]{0}', space=vmem, size = 0x2000, scoped, tag = 'input window, operand 1, single buffered']
    #allocation6 [shape = 's32[1]{0}', space=sflag, size = 0x4, scoped, tag = 'scoped memory for tpu_custom_call.1']
    #allocation7 [shape = 'u8[262144]{0}', space=vmem, size = 0x40000, scoped, tag = 'output window, operand 0']
    %8 = vsyncpa [#allocation3], 0
    %s9 = scalar_lea.sflag [#allocation3], 1
    %10 = vsyncpa %s9, 0
    %11 = vsyncpa [#allocation6], 0
    %12 = vsyncpa [#allocation4], 0
    %s13 = scalar_lea.sflag [#allocation4], 1
    %14 = vsyncpa %s13, 0
    loop: start=0, step=1, limit=4
    $region2: #{tpu_custom_call.1} parent=1 // loop_pre_header
      _
    $region3: #{tpu_custom_call.1} parent=1 // loop_header
      %s16 = sphi 0, %s20
      %p17 = scmp.ge.s32.totalorder %s16, 4
      %s26 = sphi 0, %s28
      %s29 = sphi 0, %s26
      %s30 = sphi 0, %s29
      %s46 = sphi 0, %s30
      %s50 = sphi 0, %s50
      %s52 = sphi 0, %s50
      %s53 = sphi 0, %s52
      %s67 = sphi 0, %s53
      %s71 = sphi 0, %s71
      %s73 = sphi 0, %s71
      %s74 = sphi 0, %s73
      %s88 = sphi 0, %s74
      %s94 = sphi 0, %s96
      %s97 = sphi 0, %s94
      %s98 = sphi 0, %s97
      %s114 = sphi 0, %s98
    $region4: #{tpu_custom_call.1} parent=1 // loop_header_branch
      %19 = sbr.rel (%p17) target = $region8
    $region5: #{tpu_custom_call.1} parent=1 // loop_body
      %s21 = ssub.s32 %s16, 1
      %s22 = ssub.s32 %s16, 2
      %s23 = sadd.s32 %s16, 1
      %s24 = ssub.s32 %s16, %s23
      %p25 = scmp.eq.s32.totalorder %s24, 0
      %s27 = sadd.s32 %s26, 1
      %s28 = scalar_select %p25, %s26, %s27
      %p31 = pneg %p25
      %p32 = scmp.eq.s32.totalorder %s16, 1
      %p33 = por %p31, %p32
      %p34 = scmp.ne.s32.totalorder %s26, %s29
      %p35 = scmp.eq.s32.totalorder %s16, 0
      %p36 = por %p34, %p35
      %p37 = scmp.ne.s32.totalorder %s26, %s29
      %p38 = scmp.eq.s32.totalorder %s21, 1
      %p39 = por %p37, %p38
      %p40 = scmp.ne.s32.totalorder %s29, %s30
      %p41 = scmp.eq.s32.totalorder %s21, 0
      %p42 = por %p40, %p41
      %p43 = scmp.ne.s32.totalorder %s29, %s30
      %p44 = scmp.eq.s32.totalorder %s22, 1
      %p45 = por %p43, %p44
      %p47 = scmp.ne.s32.totalorder %s30, %s46
      %p48 = scmp.eq.s32.totalorder %s22, 0
      %p49 = por %p47, %p48
      %s51 = sadd.s32 %s50, 1
      %p54 = scmp.eq.s32.totalorder %s16, 1
      %p55 = scmp.ne.s32.totalorder %s50, %s52
      %p56 = scmp.eq.s32.totalorder %s16, 0
      %p57 = por %p55, %p56
      %p58 = scmp.ne.s32.totalorder %s50, %s52
      %p59 = scmp.eq.s32.totalorder %s21, 1
      %p60 = por %p58, %p59
      %p61 = scmp.ne.s32.totalorder %s52, %s53
      %p62 = scmp.eq.s32.totalorder %s21, 0
      %p63 = por %p61, %p62
      %p64 = scmp.ne.s32.totalorder %s52, %s53
      %p65 = scmp.eq.s32.totalorder %s22, 1
      %p66 = por %p64, %p65
      %p68 = scmp.ne.s32.totalorder %s53, %s67
      %p69 = scmp.eq.s32.totalorder %s22, 0
      %p70 = por %p68, %p69
      %s72 = sadd.s32 %s71, 1
      %p75 = scmp.eq.s32.totalorder %s16, 1
      %p76 = scmp.ne.s32.totalorder %s71, %s73
      %p77 = scmp.eq.s32.totalorder %s16, 0
      %p78 = por %p76, %p77
      %p79 = scmp.ne.s32.totalorder %s71, %s73
      %p80 = scmp.eq.s32.totalorder %s21, 1
      %p81 = por %p79, %p80
      %p82 = scmp.ne.s32.totalorder %s73, %s74
      %p83 = scmp.eq.s32.totalorder %s21, 0
      %p84 = por %p82, %p83
      %p85 = scmp.ne.s32.totalorder %s73, %s74
      %p86 = scmp.eq.s32.totalorder %s22, 1
      %p87 = por %p85, %p86
      %p89 = scmp.ne.s32.totalorder %s74, %s88
      %p90 = scmp.eq.s32.totalorder %s22, 0
      %p91 = por %p89, %p90
      %s92 = ssub.s32 %s16, %s23
      %p93 = scmp.eq.s32.totalorder %s92, 0
      %s95 = sadd.s32 %s94, 1
      %s96 = scalar_select %p93, %s94, %s95
      %p99 = pneg %p93
      %p100 = scmp.eq.s32.totalorder %s16, 1
      %p101 = por %p99, %p100
      %p102 = scmp.ne.s32.totalorder %s94, %s97
      %p103 = scmp.eq.s32.totalorder %s16, 0
      %p104 = por %p102, %p103
      %p105 = scmp.ne.s32.totalorder %s94, %s97
      %p106 = scmp.eq.s32.totalorder %s21, 1
      %p107 = por %p105, %p106
      %p108 = scmp.ne.s32.totalorder %s97, %s98
      %p109 = scmp.eq.s32.totalorder %s21, 0
      %p110 = por %p108, %p109
      %p111 = scmp.ne.s32.totalorder %s97, %s98
      %p112 = scmp.eq.s32.totalorder %s22, 1
      %p113 = por %p111, %p112
      %p115 = scmp.ne.s32.totalorder %s98, %s114
      %p116 = scmp.eq.s32.totalorder %s22, 0
      %p117 = por %p115, %p116
      %p118 = scmp.le.s32.totalorder 1, %s16
      %p119 = scmp.lt.s32.totalorder %s16, 3
      %p120 = pnand %p118, %p119
      %p121 = pneg %p120
      // Predicated region
      $region9: #{tpu_custom_call.1} parent=5 // pred_check
        _
      $region10: #{tpu_custom_call.1} parent=5 // pred_check_branch
        %123 = sbr.rel (%p120) target = $region12
      $region11: #{tpu_custom_call.1} parent=5 // pred_region
        %s124 = ssub.s32 %s16, 1
        // Predicated region
        $region13: #{tpu_custom_call.1} parent=11 // pred_check
          %p125 = pneg %p63
        $region14: #{tpu_custom_call.1} parent=11 // pred_check_branch
          %127 = sbr.rel (%p125) target = $region16
        $region15: #{tpu_custom_call.1} parent=11 // pred_region
          %s129 = ssub.s32 256, 256
          %130 = vsyncadd [#allocation6], %s129
          %s131 = sshll.u32 [#allocation5], 4
          %s132 = int_to_ptr.vmem [resolvable:$true] %s131
          %137 = dma.hbm_to_vmem [thread:$0]  %s1, 256, %s132, [#allocation6], 128, 128, 8
        $region16: #{tpu_custom_call.1} parent=11 // pred_fallthru
          _
        // Predicated region
        $region17: #{tpu_custom_call.1} parent=11 // pred_check
          %p138 = pneg %p84
        $region18: #{tpu_custom_call.1} parent=11 // pred_check_branch
          %140 = sbr.rel (%p138) target = $region20
        $region19: #{tpu_custom_call.1} parent=11 // pred_region
          _
        $region20: #{tpu_custom_call.1} parent=11 // pred_fallthru
          _
      $region12: #{tpu_custom_call.1} parent=5 // pred_fallthru
        _
      %p141 = scmp.lt.s32.totalorder %s16, 2
      // Predicated region
      $region21: #{tpu_custom_call.1} parent=5 // pred_check
        %p142 = pneg %p141
      $region22: #{tpu_custom_call.1} parent=5 // pred_check_branch
        %144 = sbr.rel (%p142) target = $region24
      $region23: #{tpu_custom_call.1} parent=5 // pred_region
        // Predicated region
        $region25: #{tpu_custom_call.1} parent=23 // pred_check
          %p145 = pneg %p36
        $region26: #{tpu_custom_call.1} parent=23 // pred_check_branch
          %147 = sbr.rel (%p145) target = $region28
        $region27: #{tpu_custom_call.1} parent=23 // pred_region
          %s148 = sand.u32 %s26, 1
          %s149 = scalar_lea.sflag [#allocation3], %s148
          %s150 = sand.u32 %s26, 1
          %s151 = smul.addr %s150, 256
          %s152 = scalar_lea.vmem [#allocation2], %s151
          %s154 = ssub.s32 4096, 4096
          %155 = vsyncadd %s149, %s154
          %s156 = smul.addr %s16, 32
          %s157 = smul.addr %s156, 128
          %s158 = scalar_lea.hbm %s0, %s157
          %s159 = sshll.u32 %s152, 4
          %s160 = int_to_ptr.vmem [resolvable:$true] %s159
          %165 = dma.hbm_to_vmem [thread:$0]  %s158, 4096, %s160, %s149, 256, 256, 16
        $region28: #{tpu_custom_call.1} parent=23 // pred_fallthru
          _
      $region24: #{tpu_custom_call.1} parent=5 // pred_fallthru
        _
      %p166 = scmp.le.s32.totalorder 1, %s16
      %p167 = scmp.lt.s32.totalorder %s16, 3
      %p168 = pnand %p166, %p167
      %p169 = pneg %p168
      // Predicated region
      $region29: #{tpu_custom_call.1} parent=5 // pred_check
        _
      $region30: #{tpu_custom_call.1} parent=5 // pred_check_branch
        %171 = sbr.rel (%p168) target = $region32
      $region31: #{tpu_custom_call.1} parent=5 // pred_region
        %s172 = ssub.s32 %s16, 1
        %s173 = sand.u32 %s29, 1
        %s174 = scalar_lea.sflag [#allocation3], %s173
        %s175 = sand.u32 %s29, 1
        %s176 = smul.addr %s175, 256
        %s177 = scalar_lea.vmem [#allocation2], %s176
        // Predicated region
        $region33: #{tpu_custom_call.1} parent=31 // pred_check
          %p178 = pneg %p42
        $region34: #{tpu_custom_call.1} parent=31 // pred_check_branch
          %180 = sbr.rel (%p178) target = $region36
        $region35: #{tpu_custom_call.1} parent=31 // pred_region
          %181 = dma.done %s174, 4096
        $region36: #{tpu_custom_call.1} parent=31 // pred_fallthru
          _
        // Predicated region
        $region37: #{tpu_custom_call.1} parent=31 // pred_check
          %p182 = pneg %p63
        $region38: #{tpu_custom_call.1} parent=31 // pred_check_branch
          %184 = sbr.rel (%p182) target = $region40
        $region39: #{tpu_custom_call.1} parent=31 // pred_region
          %185 = dma.done [#allocation6], 256
        $region40: #{tpu_custom_call.1} parent=31 // pred_fallthru
          _
        %s186 = sand.u32 %s29, 1
        %s187 = scalar_lea.sflag [#allocation3], %s186
        %s188 = sand.u32 %s29, 1
        %s189 = smul.addr %s188, 256
        %s190 = scalar_lea.vmem [#allocation2], %s189
        %p191 = pneg %p42
        %p192 = pneg %p39
        %p193 = pneg %p63
        %p194 = pneg %p60
        %p195 = pneg %p84
        %p196 = pneg %p81
        %p197 = pneg %p110
        %p198 = pneg %p107
        %s199 = sand.u32 %s97, 1
        %s200 = scalar_lea.sflag [#allocation4], %s199
        %s201 = sand.u32 %s97, 1
        %s202 = smul.addr %s201, 256
        %s203 = scalar_lea.vmem [#allocation7], %s202
        %v204 = vld [vmem:[%s177] sm:$0xff]
        %v205 = vld [vmem:[%s177 + $0x8] sm:$0xff]
        %v206 = vld [vmem:[%s177 + $0x10] sm:$0xff]
        %v207 = vld [vmem:[%s177 + $0x18] sm:$0xff]
        %s208 = scalar_lea.vmem %s177, 32 [#allocation2]
        %v209 = vld [vmem:[%s208] sm:$0xff]
        %v210 = vld [vmem:[%s208 + $0x8] sm:$0xff]
        %v211 = vld [vmem:[%s208 + $0x10] sm:$0xff]
        %v212 = vld [vmem:[%s208 + $0x18] sm:$0xff]
        %v213 = vsub.f32 %v209, %v204
        %v214 = vsub.f32 %v210, %v205
        %v215 = vsub.f32 %v211, %v206
        %v216 = vsub.f32 %v212, %v207
        %v217 = vmul.f32 %v213, %v213
        %v218 = vmul.f32 %v214, %v214
        %v219 = vmul.f32 %v215, %v215
        %v220 = vmul.f32 %v216, %v216
        %v221 = vadd.f32 %v217, %v218
        %222 = vadd.xlane.f32.xlu0 %v221
        %v223 = vpop.xlane.xlu0 %222
        %v224 = vadd.f32 %v219, %v220
        %225 = vadd.xlane.f32.xlu0 %v224
        %v226 = vpop.xlane.xlu0 %225
        %v227 = vadd.f32 %v223, 0.0
        %v228 = vadd.f32 %v226, 0.0
        %s229 = scalar_lea.vmem %s177, 64 [#allocation2]
        %v230 = vld [vmem:[%s229] sm:$0xff]
        %v231 = vld [vmem:[%s229 + $0x8] sm:$0xff]
        %v232 = vld [vmem:[%s229 + $0x10] sm:$0xff]
        %v233 = vld [vmem:[%s229 + $0x18] sm:$0xff]
        %v234 = vsub.f32 %v230, %v209
        %v235 = vsub.f32 %v231, %v210
        %v236 = vsub.f32 %v232, %v211
        %v237 = vsub.f32 %v233, %v212
        %v238 = vmul.f32 %v234, %v234
        %v239 = vmul.f32 %v235, %v235
        %v240 = vmul.f32 %v236, %v236
        %v241 = vmul.f32 %v237, %v237
        %v242 = vadd.f32 %v238, %v239
        %243 = vadd.xlane.f32.xlu0 %v242
        %v244 = vpop.xlane.xlu0 %243
        %v245 = vadd.f32 %v240, %v241
        %246 = vadd.xlane.f32.xlu0 %v245
        %v247 = vpop.xlane.xlu0 %246
        %v248 = vadd.f32 %v227, %v244
        %v249 = vadd.f32 %v228, %v247
        %s250 = scalar_lea.vmem %s177, 96 [#allocation2]
        %v251 = vld [vmem:[%s250] sm:$0xff]
        %v252 = vld [vmem:[%s250 + $0x8] sm:$0xff]
        %v253 = vld [vmem:[%s250 + $0x10] sm:$0xff]
        %v254 = vld [vmem:[%s250 + $0x18] sm:$0xff]
        %v255 = vsub.f32 %v251, %v230
        %v256 = vsub.f32 %v252, %v231
        %v257 = vsub.f32 %v253, %v232
        %v258 = vsub.f32 %v254, %v233
        %v259 = vmul.f32 %v255, %v255
        %v260 = vmul.f32 %v256, %v256
        %v261 = vmul.f32 %v257, %v257
        %v262 = vmul.f32 %v258, %v258
        %v263 = vadd.f32 %v259, %v260
        %264 = vadd.xlane.f32.xlu0 %v263
        %v265 = vpop.xlane.xlu0 %264
        %v266 = vadd.f32 %v261, %v262
        %267 = vadd.xlane.f32.xlu0 %v266
        %v268 = vpop.xlane.xlu0 %267
        %v269 = vadd.f32 %v248, %v265
        %v270 = vadd.f32 %v249, %v268
        %s271 = scalar_lea.vmem %s177, 128 [#allocation2]
        %v272 = vld [vmem:[%s271] sm:$0xff]
        %v273 = vld [vmem:[%s271 + $0x8] sm:$0xff]
        %v274 = vld [vmem:[%s271 + $0x10] sm:$0xff]
        %v275 = vld [vmem:[%s271 + $0x18] sm:$0xff]
        %v276 = vsub.f32 %v272, %v251
        %v277 = vsub.f32 %v273, %v252
        %v278 = vsub.f32 %v274, %v253
        %v279 = vsub.f32 %v275, %v254
        %v280 = vmul.f32 %v276, %v276
        %v281 = vmul.f32 %v277, %v277
        %v282 = vmul.f32 %v278, %v278
        %v283 = vmul.f32 %v279, %v279
        %v284 = vadd.f32 %v280, %v281
        %285 = vadd.xlane.f32.xlu0 %v284
        %v286 = vpop.xlane.xlu0 %285
        %v287 = vadd.f32 %v282, %v283
        %288 = vadd.xlane.f32.xlu0 %v287
        %v289 = vpop.xlane.xlu0 %288
        %v290 = vadd.f32 %v269, %v286
        %v291 = vadd.f32 %v270, %v289
        %s292 = scalar_lea.vmem %s177, 160 [#allocation2]
        %v293 = vld [vmem:[%s292] sm:$0xff]
        %v294 = vld [vmem:[%s292 + $0x8] sm:$0xff]
        %v295 = vld [vmem:[%s292 + $0x10] sm:$0xff]
        %v296 = vld [vmem:[%s292 + $0x18] sm:$0xff]
        %v297 = vsub.f32 %v293, %v272
        %v298 = vsub.f32 %v294, %v273
        %v299 = vsub.f32 %v295, %v274
        %v300 = vsub.f32 %v296, %v275
        %v301 = vmul.f32 %v297, %v297
        %v302 = vmul.f32 %v298, %v298
        %v303 = vmul.f32 %v299, %v299
        %v304 = vmul.f32 %v300, %v300
        %v305 = vadd.f32 %v301, %v302
        %306 = vadd.xlane.f32.xlu0 %v305
        %v307 = vpop.xlane.xlu0 %306
        %v308 = vadd.f32 %v303, %v304
        %309 = vadd.xlane.f32.xlu0 %v308
        %v310 = vpop.xlane.xlu0 %309
        %v311 = vadd.f32 %v290, %v307
        %v312 = vadd.f32 %v291, %v310
        %s313 = scalar_lea.vmem %s177, 192 [#allocation2]
        %v314 = vld [vmem:[%s313] sm:$0xff]
        %v315 = vld [vmem:[%s313 + $0x8] sm:$0xff]
        %v316 = vld [vmem:[%s313 + $0x10] sm:$0xff]
        %v317 = vld [vmem:[%s313 + $0x18] sm:$0xff]
        %v318 = vsub.f32 %v314, %v293
        %v319 = vsub.f32 %v315, %v294
        %v320 = vsub.f32 %v316, %v295
        %v321 = vsub.f32 %v317, %v296
        %v322 = vmul.f32 %v318, %v318
        %v323 = vmul.f32 %v319, %v319
        %v324 = vmul.f32 %v320, %v320
        %v325 = vmul.f32 %v321, %v321
        %v326 = vadd.f32 %v322, %v323
        %327 = vadd.xlane.f32.xlu0 %v326
        %v328 = vpop.xlane.xlu0 %327
        %v329 = vadd.f32 %v324, %v325
        %330 = vadd.xlane.f32.xlu0 %v329
        %v331 = vpop.xlane.xlu0 %330
        %v332 = vadd.f32 %v311, %v328
        %v333 = vadd.f32 %v312, %v331
        %s334 = scalar_lea.vmem %s177, 224 [#allocation2]
        %v335 = vld [vmem:[%s334] sm:$0xff]
        %v336 = vld [vmem:[%s334 + $0x8] sm:$0xff]
        %v337 = vld [vmem:[%s334 + $0x10] sm:$0xff]
        %v338 = vld [vmem:[%s334 + $0x18] sm:$0xff]
        %v339 = vsub.f32 %v335, %v314
        %v340 = vsub.f32 %v336, %v315
        %v341 = vsub.f32 %v337, %v316
        %v342 = vsub.f32 %v338, %v317
        %v343 = vmul.f32 %v339, %v339
        %v344 = vmul.f32 %v340, %v340
        %v345 = vmul.f32 %v341, %v341
        %v346 = vmul.f32 %v342, %v342
        %v347 = vadd.f32 %v343, %v344
        %348 = vadd.xlane.f32.xlu0 %v347
        %v349 = vpop.xlane.xlu0 %348
        %v350 = vadd.f32 %v345, %v346
        %351 = vadd.xlane.f32.xlu0 %v350
        %v352 = vpop.xlane.xlu0 %351
        %v353 = vadd.f32 %v332, %v349
        %v354 = vadd.f32 %v333, %v352
        %v355 = vmul.f32 %v353, 0.00055803574
        %v356 = vmul.f32 %v354, 0.00055803574
        %v357 = vld [vmem:[#allocation5] sm:$0xff]
        %v358 = vld [vmem:[#allocation5 + $0x8] sm:$0xff]
        %v359 = vld [vmem:[%s2] sm:$0x1]
        %v362 = vlaneseq
        %v363 = vand.u32 %v362, 127
        %v364 = vlaneseq
        %v365 = vshrl.u32 %v364, 7
        %v366 = vsub.s32 %v363, %v365
        %v367 = vrot.slane %v355, %v366
        %v368 = vadd.s32 %v363, 4294967288
        %v369 = vlaneseq
        %v370 = vshrl.u32 %v369, 7
        %v371 = vsub.s32 %v368, %v370
        %v372 = vrot.slane %v356, %v371
        %vm373 = vcmask 130112
        %v374 = vsel %vm373, %v372, %v367
        %vm375 = vcmask 130048
        %v376 = vsel %vm375, %v374, 0
        %378 = vmatprep.subr.mxu0 0.0
        %379 = vmatpush1.msra.mxu0 0.0
        %380 = vmatprep.subr.mxu0 0.0
        %381 = vmatpush1.msra.mxu0 0.0
        %382 = vmatprep.subr.mxu0 0.0
        %383 = vmatpush1.msra.mxu0 0.0
        %384 = vmatprep.subr.mxu0 0.0
        %385 = vmatpush1.msra.mxu0 0.0
        %386 = vmatprep.subr.mxu0 0.0
        %387 = vmatpush1.msra.mxu0 0.0
        %388 = vmatprep.subr.mxu0 0.0
        %389 = vmatpush1.msra.mxu0 0.0
        %390 = vmatprep.subr.mxu0 0.0
        %391 = vmatpush1.msra.mxu0 0.0
        %392 = vmatprep.subr.mxu0 0.0
        %393 = vmatpush1.msra.mxu0 0.0
        %394 = vmatprep.subr.mxu0 0.0
        %395 = vmatpush1.msra.mxu0 0.0
        %396 = vmatprep.subr.mxu0 0.0
        %397 = vmatpush1.msra.mxu0 0.0
        %398 = vmatprep.subr.mxu0 0.0
        %399 = vmatpush1.msra.mxu0 0.0
        %400 = vmatprep.subr.mxu0 0.0
        %401 = vmatpush1.msra.mxu0 0.0
        %402 = vmatprep.subr.mxu0 0.0
        %403 = vmatpush1.msra.mxu0 0.0
        %404 = vmatprep.subr.mxu0 0.0
        %405 = vmatpush1.msra.mxu0 0.0
        %406 = vmatprep.subr.mxu0 0.0
        %407 = vmatpush1.msra.mxu0 %v358
        %408 = vmatprep.subr.mxu0 0.0
        %409 = vmatpush1.msra.mxu0 %v357
        %410 = vmatprep.subr.mxu0 0.0
        %411 = vmatpush2.msra.mxu0 0.0
        %412 = vmatprep.subr.mxu0 0.0
        %413 = vmatpush2.msra.mxu0 0.0
        %414 = vmatprep.subr.mxu0 0.0
        %415 = vmatpush2.msra.mxu0 0.0
        %416 = vmatprep.subr.mxu0 0.0
        %417 = vmatpush2.msra.mxu0 0.0
        %418 = vmatprep.subr.mxu0 0.0
        %419 = vmatpush2.msra.mxu0 0.0
        %420 = vmatprep.subr.mxu0 0.0
        %421 = vmatpush2.msra.mxu0 0.0
        %422 = vmatprep.subr.mxu0 0.0
        %423 = vmatpush2.msra.mxu0 0.0
        %424 = vmatprep.subr.mxu0 0.0
        %425 = vmatpush2.msra.mxu0 0.0
        %426 = vmatprep.subr.mxu0 0.0
        %427 = vmatpush2.msra.mxu0 0.0
        %428 = vmatprep.subr.mxu0 0.0
        %429 = vmatpush2.msra.mxu0 0.0
        %430 = vmatprep.subr.mxu0 0.0
        %431 = vmatpush2.msra.mxu0 0.0
        %432 = vmatprep.subr.mxu0 0.0
        %433 = vmatpush2.msra.mxu0 0.0
        %434 = vmatprep.subr.mxu0 0.0
        %435 = vmatpush2.msra.mxu0 0.0
        %436 = vmatprep.subr.mxu0 0.0
        %437 = vmatpush2.msra.mxu0 0.0
        %438 = vmatprep.subr.mxu0 0.0
        %439 = vmatpush2.msra.mxu0 0.0
        %440 = vmatprep.subr.mxu0 0.0
        %441 = vmatpush2.msra.mxu0 0.0
        %442 = vmatprep.mubr.f32.mxu0 0.0
        %443 = vmatmul.mubr.f32.gmra.mxu0 %v376
        %v444 = vpop.f32.mrf.mxu0
        %v445 = vadd.f32 %v359, %v444
        %v446 = vpop.f32.mrf.mxu0
        %447 = vdwg.mxu0
        %v448 = vxor.u32 %v445, 2147483648
        %v449 = vmul.f32 %v448, 1.442695
        %v450 = vpow.pop %v449
        %v451 = vadd.f32 %v450, 1.0
        %v452 = vrcp.pop %v451
        %v453 = vmul.f32 1.0, %v452
        %v454 = vlaneseq
        %v455 = vshrl.u32 %v454, 7
        %v456 = vsub.s32 0, %v455
        %v457 = vrot.slane %v453, %v456
        %459 = vbcast.lane.b32.xlu0 %v457, 256
        %v460 = vpop.permute.xlu0 %459
        %s462 = sor.u32 256, 8
        %463 = vbcast.lane.b32.xlu0 %v457, %s462
        %v464 = vpop.permute.xlu0 %463
        %v465 = vmul.f32 %v204, %v460
        %v466 = vmul.f32 %v205, %v460
        %v467 = vmul.f32 %v206, %v464
        %v468 = vmul.f32 %v207, %v464
        %469 = vst [vmem:[%s203] sm:$0xff] %v465
        %470 = vst [vmem:[%s203 + $0x8] sm:$0xff] %v466
        %471 = vst [vmem:[%s203 + $0x10] sm:$0xff] %v467
        %472 = vst [vmem:[%s203 + $0x18] sm:$0xff] %v468
        %v473 = vld [vmem:[%s208] sm:$0xff]
        %v474 = vld [vmem:[%s208 + $0x8] sm:$0xff]
        %v475 = vld [vmem:[%s208 + $0x10] sm:$0xff]
        %v476 = vld [vmem:[%s208 + $0x18] sm:$0xff]
        %v477 = vmul.f32 %v473, %v460
        %v478 = vmul.f32 %v474, %v460
        %v479 = vmul.f32 %v475, %v464
        %v480 = vmul.f32 %v476, %v464
        %s481 = scalar_lea.vmem %s203, 32 [#allocation7]
        %482 = vst [vmem:[%s481] sm:$0xff] %v477
        %483 = vst [vmem:[%s481 + $0x8] sm:$0xff] %v478
        %484 = vst [vmem:[%s481 + $0x10] sm:$0xff] %v479
        %485 = vst [vmem:[%s481 + $0x18] sm:$0xff] %v480
        %v486 = vld [vmem:[%s229] sm:$0xff]
        %v487 = vld [vmem:[%s229 + $0x8] sm:$0xff]
        %v488 = vld [vmem:[%s229 + $0x10] sm:$0xff]
        %v489 = vld [vmem:[%s229 + $0x18] sm:$0xff]
        %v490 = vmul.f32 %v486, %v460
        %v491 = vmul.f32 %v487, %v460
        %v492 = vmul.f32 %v488, %v464
        %v493 = vmul.f32 %v489, %v464
        %s494 = scalar_lea.vmem %s203, 64 [#allocation7]
        %495 = vst [vmem:[%s494] sm:$0xff] %v490
        %496 = vst [vmem:[%s494 + $0x8] sm:$0xff] %v491
        %497 = vst [vmem:[%s494 + $0x10] sm:$0xff] %v492
        %498 = vst [vmem:[%s494 + $0x18] sm:$0xff] %v493
        %v499 = vld [vmem:[%s250] sm:$0xff]
        %v500 = vld [vmem:[%s250 + $0x8] sm:$0xff]
        %v501 = vld [vmem:[%s250 + $0x10] sm:$0xff]
        %v502 = vld [vmem:[%s250 + $0x18] sm:$0xff]
        %v503 = vmul.f32 %v499, %v460
        %v504 = vmul.f32 %v500, %v460
        %v505 = vmul.f32 %v501, %v464
        %v506 = vmul.f32 %v502, %v464
        %s507 = scalar_lea.vmem %s203, 96 [#allocation7]
        %508 = vst [vmem:[%s507] sm:$0xff] %v503
        %509 = vst [vmem:[%s507 + $0x8] sm:$0xff] %v504
        %510 = vst [vmem:[%s507 + $0x10] sm:$0xff] %v505
        %511 = vst [vmem:[%s507 + $0x18] sm:$0xff] %v506
        %v512 = vld [vmem:[%s271] sm:$0xff]
        %v513 = vld [vmem:[%s271 + $0x8] sm:$0xff]
        %v514 = vld [vmem:[%s271 + $0x10] sm:$0xff]
        %v515 = vld [vmem:[%s271 + $0x18] sm:$0xff]
        %v516 = vmul.f32 %v512, %v460
        %v517 = vmul.f32 %v513, %v460
        %v518 = vmul.f32 %v514, %v464
        %v519 = vmul.f32 %v515, %v464
        %s520 = scalar_lea.vmem %s203, 128 [#allocation7]
        %521 = vst [vmem:[%s520] sm:$0xff] %v516
        %522 = vst [vmem:[%s520 + $0x8] sm:$0xff] %v517
        %523 = vst [vmem:[%s520 + $0x10] sm:$0xff] %v518
        %524 = vst [vmem:[%s520 + $0x18] sm:$0xff] %v519
        %v525 = vld [vmem:[%s292] sm:$0xff]
        %v526 = vld [vmem:[%s292 + $0x8] sm:$0xff]
        %v527 = vld [vmem:[%s292 + $0x10] sm:$0xff]
        %v528 = vld [vmem:[%s292 + $0x18] sm:$0xff]
        %v529 = vmul.f32 %v525, %v460
        %v530 = vmul.f32 %v526, %v460
        %v531 = vmul.f32 %v527, %v464
        %v532 = vmul.f32 %v528, %v464
        %s533 = scalar_lea.vmem %s203, 160 [#allocation7]
        %534 = vst [vmem:[%s533] sm:$0xff] %v529
        %535 = vst [vmem:[%s533 + $0x8] sm:$0xff] %v530
        %536 = vst [vmem:[%s533 + $0x10] sm:$0xff] %v531
        %537 = vst [vmem:[%s533 + $0x18] sm:$0xff] %v532
        %v538 = vld [vmem:[%s313] sm:$0xff]
        %v539 = vld [vmem:[%s313 + $0x8] sm:$0xff]
        %v540 = vld [vmem:[%s313 + $0x10] sm:$0xff]
        %v541 = vld [vmem:[%s313 + $0x18] sm:$0xff]
        %v542 = vmul.f32 %v538, %v460
        %v543 = vmul.f32 %v539, %v460
        %v544 = vmul.f32 %v540, %v464
        %v545 = vmul.f32 %v541, %v464
        %s546 = scalar_lea.vmem %s203, 192 [#allocation7]
        %547 = vst [vmem:[%s546] sm:$0xff] %v542
        %548 = vst [vmem:[%s546 + $0x8] sm:$0xff] %v543
        %549 = vst [vmem:[%s546 + $0x10] sm:$0xff] %v544
        %550 = vst [vmem:[%s546 + $0x18] sm:$0xff] %v545
        %v551 = vld [vmem:[%s334] sm:$0xff]
        %v552 = vld [vmem:[%s334 + $0x8] sm:$0xff]
        %v553 = vld [vmem:[%s334 + $0x10] sm:$0xff]
        %v554 = vld [vmem:[%s334 + $0x18] sm:$0xff]
        %v555 = vmul.f32 %v551, %v460
        %v556 = vmul.f32 %v552, %v460
        %v557 = vmul.f32 %v553, %v464
        %v558 = vmul.f32 %v554, %v464
        %s559 = scalar_lea.vmem %s203, 224 [#allocation7]
        %560 = vst [vmem:[%s559] sm:$0xff] %v555
        %561 = vst [vmem:[%s559 + $0x8] sm:$0xff] %v556
        %562 = vst [vmem:[%s559 + $0x10] sm:$0xff] %v557
        %563 = vst [vmem:[%s559 + $0x18] sm:$0xff] %v558
        %s564 = sand.u32 %s97, 1
        %s565 = scalar_lea.sflag [#allocation4], %s564
        %s566 = sand.u32 %s97, 1
        %s567 = smul.addr %s566, 256
        %s568 = scalar_lea.vmem [#allocation7], %s567
        // Predicated region
        $region41: #{tpu_custom_call.1} parent=31 // pred_check
          %p569 = pneg %p107
        $region42: #{tpu_custom_call.1} parent=31 // pred_check_branch
          %571 = sbr.rel (%p569) target = $region44
        $region43: #{tpu_custom_call.1} parent=31 // pred_region
          %s573 = ssub.s32 4096, 4096
          %574 = vsyncadd %s565, %s573
          %s575 = smul.addr %s21, 32
          %s576 = smul.addr %s575, 128
          %s577 = scalar_lea.hbm %s3, %s576
          %s578 = sshll.u32 %s568, 4
          %s579 = int_to_ptr.vmem [resolvable:$true] %s578
          %584 = dma.vmem_to_hbm [thread:$0]  %s579, 4096, %s577, %s565, 256, 256, 16
        $region44: #{tpu_custom_call.1} parent=31 // pred_fallthru
          _
      $region32: #{tpu_custom_call.1} parent=5 // pred_fallthru
        _
      %p585 = scmp.le.s32.totalorder 2, %s16
      // Predicated region
      $region45: #{tpu_custom_call.1} parent=5 // pred_check
        %p586 = pneg %p585
      $region46: #{tpu_custom_call.1} parent=5 // pred_check_branch
        %588 = sbr.rel (%p586) target = $region48
      $region47: #{tpu_custom_call.1} parent=5 // pred_region
        %s589 = ssub.s32 %s16, 2
        // Predicated region
        $region49: #{tpu_custom_call.1} parent=47 // pred_check
          %p590 = pneg %p113
        $region50: #{tpu_custom_call.1} parent=47 // pred_check_branch
          %592 = sbr.rel (%p590) target = $region52
        $region51: #{tpu_custom_call.1} parent=47 // pred_region
          %s593 = sand.u32 %s98, 1
          %s594 = scalar_lea.sflag [#allocation4], %s593
          %s595 = sand.u32 %s98, 1
          %s596 = smul.addr %s595, 256
          %s597 = scalar_lea.vmem [#allocation7], %s596
          %598 = dma.done %s594, 4096
        $region52: #{tpu_custom_call.1} parent=47 // pred_fallthru
          _
      $region48: #{tpu_custom_call.1} parent=5 // pred_fallthru
        _
    $region6: #{tpu_custom_call.1} parent=1 // loop_footer
      %s20 = sadd.s32 1, %s16
    $region7: #{tpu_custom_call.1} parent=1 // loop_footer_branch
      %15 = sbr.rel target = $region3
    $region8: #{tpu_custom_call.1} parent=1 // loop_exit
      _
    %599 = vsyncpa [#allocation3], 1
    %s600 = scalar_lea.sflag [#allocation3], 1
    %601 = vsyncpa %s600, 1
    %602 = vsyncpa [#allocation6], 1
    %603 = vsyncpa [#allocation4], 1
    %s604 = scalar_lea.sflag [#allocation4], 1
    %605 = vsyncpa %s604, 1

</llo_original>
